<compile_context>
chip_gen: v6e
topology: v6e:2x2x1
jax: 0.10.0
libtpu: 0.0.40
codegen_flags: <defaults>
</compile_context>

<pallas_src>
import functools

import numpy as np
import jax
import jax.numpy as jnp
from jax.experimental import pallas as pl
from jax.experimental.pallas import tpu as pltpu


# -----------------------------------------------------------------------------
# One-time hardware detection (module level, never on the per-call path).
# -----------------------------------------------------------------------------
def _tensorcores_per_device():
    """#TensorCores behind one JAX device (v7x: 2, v5e/v6e: 1). Defaults to 1."""
    try:
        info = pltpu.get_tpu_info()
        for attr in ("num_cores", "core_count", "num_tensorcores",
                     "tensor_core_count", "num_cores_per_chip"):
            n = getattr(info, attr, None)
            if isinstance(n, int) and n >= 1:
                return n
    except Exception:
        pass
    return 1


_TC_PER_DEVICE = _tensorcores_per_device()


# -----------------------------------------------------------------------------
# Kernel
# -----------------------------------------------------------------------------
def _block_b_kernel(x_ref, w0_ref, b0_ref, wf_ref, bf_ref, sf_ref, tf_ref,
                    out_ref, *, w_valid):
    NB, H, W, C = x_ref.shape        # W is the internal (>=8-padded) width
    M = NB * H * W

    x = x_ref[...].reshape(M, C)                               # f32 skip path

    # conv0: 1x1 Conv (BN folded into w/b) -> ReLU. bf16 MXU operands, f32 acc.
    t = jnp.maximum(
        jnp.dot(x.astype(w0_ref.dtype), w0_ref[...],
                preferred_element_type=jnp.float32) + b0_ref[...],
        0.0)                                                   # [M, 32] f32

    # Build the 5 conv taps with pltpu.roll (XLU slot) on the flat activation
    # plus edge masks.  Rolls wrap across h / batch boundaries; the masks zero
    # those rows (== 'same' / ZeroPad2d zero padding).  No integer divide: the
    # rems are by trace-time constants (powers of two at ADS-B sizes) and do
    # not depend on the matmul output, so they overlap the first MXU push.
    ridx = jax.lax.broadcasted_iota(jnp.int32, (M, 1), 0)      # flat row index
    w_idx = ridx % W                   # column inside the padded width
    hw_idx = ridx % (H * W)            # position inside one batch element
    zero = jnp.zeros_like(t)
    t_hm1 = jnp.where(hw_idx >= W,           pltpu.roll(t, W, 0),     zero)
    t_hp1 = jnp.where(hw_idx < (H - 1) * W,  pltpu.roll(t, M - W, 0), zero)
    t_wm1 = jnp.where(w_idx >= 1,            pltpu.roll(t, 1, 0),     zero)
    t_wp1 = jnp.where(w_idx <= w_valid - 2,  pltpu.roll(t, M - 1, 0), zero)

    # Single fused branch matmul: [M,160] x [160,128], lane-dense output.
    taps = jnp.concatenate([t, t_hm1, t_hp1, t_wm1, t_wp1], axis=-1)
    acc = jnp.dot(taps.astype(wf_ref.dtype), wf_ref[...],
                  preferred_element_type=jnp.float32)          # [M, 128] f32

    # One 128-wide ReLU + BN-affine epilogue, then the residual skip.
    y = jnp.maximum(acc + bf_ref[...], 0.0) * sf_ref[...] + tf_ref[...]
    out_ref[...] = (x + y).reshape(NB, H, W, C).astype(out_ref.dtype)


# -----------------------------------------------------------------------------
# One-time parameter packing (hoisted out of the forward pass).
# -----------------------------------------------------------------------------
def pack_params(params, *, matmul_dtype=jnp.bfloat16):
    """Fold the three branch convs into one block-structured [160,128] weight
    plus fused 128-wide bias / BN-scale / BN-shift.  Built ONCE at init time
    with numpy (zero XLA ops on the per-call path)."""
    (w0e, b0e, w1, b1, s1, t1, w2, b2, s2, t2, w3, b3, s3, t3) = [
        np.asarray(p, np.float32) for p in params]
    wf = np.zeros((160, 128), np.float32)
    # input rows : 0:32 center | 32:64 h-1 | 64:96 h+1 | 96:128 w-1 | 128:160 w+1
    # output cols: 0:48 conv1(3x1) | 48:96 conv2(1x3) | 96:128 conv3(1x1)
    wf[0:32,     0:48] = w1[1]
    wf[32:64,    0:48] = w1[0]
    wf[64:96,    0:48] = w1[2]
    wf[0:32,    48:96] = w2[1]
    wf[96:128,  48:96] = w2[0]
    wf[128:160, 48:96] = w2[2]
    wf[0:32,   96:128] = w3
    bf = np.concatenate([b1, b2, b3], axis=-1)      # [1, 128]
    sf = np.concatenate([s1, s2, s3], axis=-1)      # [1, 128]
    tf = np.concatenate([t1, t2, t3], axis=-1)      # [1, 128]
    # MXU operands stored bf16 (weights are bf16-representable -> lossless);
    # biases / BN affine / skip path stay f32.
    return (jnp.asarray(w0e, matmul_dtype), jnp.asarray(b0e, jnp.float32),
            jnp.asarray(wf, matmul_dtype), jnp.asarray(bf, jnp.float32),
            jnp.asarray(sf, jnp.float32), jnp.asarray(tf, jnp.float32))


# -----------------------------------------------------------------------------
# Forward wrappers
# -----------------------------------------------------------------------------
@jax.jit
def block_b_forward_nhwc(x_nhwc, packed):
    """x_nhwc: [N, H, W, 128] float32.  Returns [N, H, W(+pad-to-even), 128]."""
    w0m, b0e, wfm, bf, sf, tf = packed
    N, H, W, C = x_nhwc.shape
    assert C == 128
    w_even = W + (W % 2)                    # torch: append a zero column if odd
    w_pad = ((w_even + 7) // 8) * 8         # sublane-clean flat reshapes
    if w_pad != W:
        x_nhwc = jnp.pad(x_nhwc, ((0, 0), (0, 0), (0, w_pad - W), (0, 0)))

    # One grid step per TensorCore behind this device (v5e/v6e: 1 -> no extra
    # pipeline step; v7x: 2 blocks split across the two TCs).
    G = _TC_PER_DEVICE if (_TC_PER_DEVICE > 1 and N % _TC_PER_DEVICE == 0) else 1
    NB = N // G
    dim_sem = (pltpu.CORE_PARALLEL,) if G > 1 else ("arbitrary",)
    # TODO(synk): for very large H*W add an H-tiling grid axis (the edge masks
    # already handle a 1-row halo) and re-derive the tile size per-generation
    # (v7x has 64 MiB physical VMEM vs 128 MiB on v5e/v6e).

    param_args = (w0m, b0e, wfm, bf, sf, tf)
    in_specs = [pl.BlockSpec((NB, H, w_pad, C), lambda g: (g, 0, 0, 0))]
    in_specs += [pl.BlockSpec(p.shape, lambda g: (0, 0)) for p in param_args]

    m_total = N * H * w_pad
    flops = 2 * m_total * (C * 32 + 160 * C)
    bytes_accessed = 2 * m_total * C * 4 + sum(
        int(p.size) * p.dtype.itemsize for p in param_args)

    kernel = functools.partial(_block_b_kernel, w_valid=w_even)
    out = pl.pallas_call(
        kernel,
        out_shape=jax.ShapeDtypeStruct((N, H, w_pad, C), x_nhwc.dtype),
        grid=(G,),
        in_specs=in_specs,
        out_specs=pl.BlockSpec((NB, H, w_pad, C), lambda g: (g, 0, 0, 0)),
        compiler_params=pltpu.CompilerParams(dimension_semantics=dim_sem),
        cost_estimate=pl.CostEstimate(flops=flops, transcendentals=0,
                                      bytes_accessed=bytes_accessed),
    )(x_nhwc, *param_args)
    if w_pad != w_even:
        out = out[:, :, :w_even, :]
    return out


@jax.jit
def block_b_forward_nchw(x_nchw, packed):
    """NCHW convenience wrapper matching the PyTorch module layout.  The two
    transposes live inside jit so XLA fuses them with neighbours; prefer the
    NHWC entry point end-to-end inside a full network."""
    out = block_b_forward_nhwc(jnp.transpose(x_nchw, (0, 2, 3, 1)), packed)
    return jnp.transpose(out, (0, 3, 1, 2))


# -----------------------------------------------------------------------------
# Deterministic parameters + pure-JAX reference
# -----------------------------------------------------------------------------
def _bf16_round(a):
    # Conv weights feed the MXU as bf16 operands; storing them pre-rounded
    # keeps the pack-time bf16 cast lossless.
    return a.astype(jnp.bfloat16).astype(jnp.float32)


def init_params(key):
    """Deterministic params. BN is inference-mode, folded to per-channel
    scale/bias. Conv weights bf16-representable; biases/BN affine f32."""
    eps = 1e-5
    ks = iter(jax.random.split(key, 32))

    def norm(shape, s=0.05):
        return (jax.random.normal(next(ks), shape) * s).astype(jnp.float32)

    def bn(c):
        g = 1.0 + norm((c,))
        b = norm((c,))
        m = norm((c,))
        v = 1.0 + jnp.abs(norm((c,)))
        s = g / jnp.sqrt(v + eps)
        t = b - m * s
        return s, t

    # conv: Conv2d(128->32,1x1)+bias, then BN(32) -> fold BN into w/b (ReLU after)
    w0 = norm((128, 32)); b0 = norm((32,))
    s0, t0 = bn(32)
    w0e = _bf16_round(w0 * s0[None, :])
    b0e = (b0 * s0 + t0).reshape(1, 32)

    # conv1: Conv2d(32->48, (3,1), 'same') -> ReLU -> BN(48)
    w1 = _bf16_round(norm((3, 32, 48))); b1 = norm((48,)).reshape(1, 48)
    s1, t1 = bn(48); s1 = s1.reshape(1, 48); t1 = t1.reshape(1, 48)

    # conv2: ZeroPad2d(1,1,0,0) + Conv2d(32->48, (1,3)) -> ReLU -> BN(48)
    w2 = _bf16_round(norm((3, 32, 48))); b2 = norm((48,)).reshape(1, 48)
    s2, t2 = bn(48); s2 = s2.reshape(1, 48); t2 = t2.reshape(1, 48)

    # conv3: Conv2d(32->32, 1x1) -> ReLU -> BN(32)
    w3 = _bf16_round(norm((32, 32))); b3 = norm((32,)).reshape(1, 32)
    s3, t3 = bn(32); s3 = s3.reshape(1, 32); t3 = t3.reshape(1, 32)

    return (w0e, b0e, w1, b1, s1, t1, w2, b2, s2, t2, w3, b3, s3, t3)


def ref_forward_nchw(x_nchw, params):
    """Pure-JAX f32 reference of _M_BlockB.forward (has_pooling=False),
    kept in the original (un-fused, per-branch) structure."""
    (w0e, b0e, w1, b1, s1, t1, w2, b2, s2, t2, w3, b3, s3, t3) = params
    N, C, H, W = x_nchw.shape
    if W % 2 != 0:
        x_nchw = jnp.pad(x_nchw, ((0, 0), (0, 0), (0, 0), (0, 1)))
        W += 1
    x = jnp.transpose(x_nchw, (0, 2, 3, 1))         # NHWC
    t = jnp.maximum(jnp.einsum('nhwc,cd->nhwd', x, w0e) + b0e, 0.0)
    tpH = jnp.pad(t, ((0, 0), (1, 1), (0, 0), (0, 0)))
    a1 = sum(jnp.einsum('nhwc,cd->nhwd', tpH[:, i:i + H], w1[i]) for i in range(3))
    y1 = jnp.maximum(a1 + b1, 0.0) * s1 + t1
    tpW = jnp.pad(t, ((0, 0), (0, 0), (1, 1), (0, 0)))
    a2 = sum(jnp.einsum('nhwc,cd->nhwd', tpW[:, :, i:i + W], w2[i]) for i in range(3))
    y2 = jnp.maximum(a2 + b2, 0.0) * s2 + t2
    y3 = jnp.maximum(jnp.einsum('nhwc,cd->nhwd', t, w3) + b3, 0.0) * s3 + t3
    out = x + jnp.concatenate([y1, y2, y3], axis=-1)
    return jnp.transpose(out, (0, 3, 1, 2))


if __name__ == "__main__":
    key = jax.random.PRNGKey(0)
    k_x, k_p = jax.random.split(key)

    # ADS-B MCNet style input: [N, C=128, H=2 (I/Q), W=16]
    x = jax.random.normal(k_x, (2, 128, 2, 16), dtype=jnp.float32)
    params = init_params(k_p)
    packed = pack_params(params)       # hoisted: built once, reused per call

    out = jax.block_until_ready(block_b_forward_nchw(x, packed))
    ref = jax.block_until_ready(ref_forward_nchw(x, params))

    assert out.shape == (2, 128, 2, 16), out.shape
    err = float(jnp.max(jnp.abs(out - ref)))
    scale = float(jnp.max(jnp.abs(ref)))
    # bf16 MXU operands through two chained matmuls: use a scale-aware bound
    # rather than a bare absolute threshold.
    assert err <= 1e-2 * max(1.0, scale), f"max abs err {err} (scale {scale})"
    print("KERNEL_OK")
</pallas_src>

<mosaic_0001>
module attributes {stable_mosaic.version = 11 : i64} {
  func.func @_block_b_kernel(%arg0: i32, %arg1: memref<2x2x16x128xf32, #tpu.memory_space<vmem>>, %arg2: memref<128x32xbf16, #tpu.memory_space<vmem>>, %arg3: memref<1x32xf32, #tpu.memory_space<vmem>>, %arg4: memref<160x128xbf16, #tpu.memory_space<vmem>>, %arg5: memref<1x128xf32, #tpu.memory_space<vmem>>, %arg6: memref<1x128xf32, #tpu.memory_space<vmem>>, %arg7: memref<1x128xf32, #tpu.memory_space<vmem>>, %arg8: memref<2x2x16x128xf32, #tpu.memory_space<vmem>>) attributes {dimension_semantics = [#tpu.dimension_semantics<arbitrary>], iteration_bounds = array<i64: 1>, scalar_prefetch = 0 : i64, scratch_operands = 0 : i64, tpu.core_type = #tpu.core_type<tc>, window_params = [{transform_indices = @transform_0, window_bounds = array<i64: 2, 2, 16, 128>}, {pipeline_mode = #tpu.pipeline_mode<synchronous>, transform_indices = @transform_1, window_bounds = array<i64: 128, 32>}, {pipeline_mode = #tpu.pipeline_mode<synchronous>, transform_indices = @transform_2, window_bounds = array<i64: 1, 32>}, {pipeline_mode = #tpu.pipeline_mode<synchronous>, transform_indices = @transform_3, window_bounds = array<i64: 160, 128>}, {pipeline_mode = #tpu.pipeline_mode<synchronous>, transform_indices = @transform_4, window_bounds = array<i64: 1, 128>}, {pipeline_mode = #tpu.pipeline_mode<synchronous>, transform_indices = @transform_5, window_bounds = array<i64: 1, 128>}, {pipeline_mode = #tpu.pipeline_mode<synchronous>, transform_indices = @transform_6, window_bounds = array<i64: 1, 128>}, {transform_indices = @transform_7, window_bounds = array<i64: 2, 2, 16, 128>}]} {
    %c0 = arith.constant 0 : index
    %c0_0 = arith.constant 0 : index
    %c0_1 = arith.constant 0 : index
    %c0_2 = arith.constant 0 : index
    %0 = vector.load %arg1[%c0, %c0_0, %c0_1, %c0_2] : memref<2x2x16x128xf32, #tpu.memory_space<vmem>>, vector<2x2x16x128xf32>
    %1 = vector.shape_cast %0 : vector<2x2x16x128xf32> to vector<64x128xf32>
    %2 = arith.truncf %1 : vector<64x128xf32> to vector<64x128xbf16>
    %c0_3 = arith.constant 0 : index
    %c0_4 = arith.constant 0 : index
    %3 = vector.load %arg2[%c0_3, %c0_4] : memref<128x32xbf16, #tpu.memory_space<vmem>>, vector<128x32xbf16>
    %cst = arith.constant dense<0.000000e+00> : vector<64x32xf32>
    %4 = tpu.matmul %2, %3, %cst {dimension_numbers = #tpu.dot_dimension_numbers<[1], [0], [0], [1], [0, 0, 1, 1], [], []>} : vector<64x128xbf16>, vector<128x32xbf16>, vector<64x32xf32> -> vector<64x32xf32>
    %c0_5 = arith.constant 0 : index
    %c0_6 = arith.constant 0 : index
    %5 = vector.load %arg3[%c0_5, %c0_6] : memref<1x32xf32, #tpu.memory_space<vmem>>, vector<1x32xf32>
    %6 = vector.broadcast %5 : vector<1x32xf32> to vector<64x32xf32>
    %7 = arith.addf %4, %6 : vector<64x32xf32>
    %cst_7 = arith.constant 0.000000e+00 : f32
    %8 = vector.broadcast %cst_7 : f32 to vector<64x32xf32>
    %9 = arith.maximumf %7, %8 : vector<64x32xf32>
    %10 = tpu.iota {dimensions = array<i32: 0>} : vector<64x1xi32>
    %c16_i32 = arith.constant 16 : i32
    %c0_i32 = arith.constant 0 : i32
    %11 = arith.cmpi eq, %c16_i32, %c0_i32 : i32
    %c1_i32 = arith.constant 1 : i32
    %12 = arith.select %11, %c1_i32, %c16_i32 : i32
    %13 = vector.broadcast %12 : i32 to vector<64x1xi32>
    %14 = arith.remsi %10, %13 : vector<64x1xi32>
    %c0_i32_8 = arith.constant 0 : i32
    %15 = vector.broadcast %c0_i32_8 : i32 to vector<64x1xi32>
    %16 = arith.cmpi ne, %14, %15 : vector<64x1xi32>
    %c0_i32_9 = arith.constant 0 : i32
    %17 = vector.broadcast %c0_i32_9 : i32 to vector<64x1xi32>
    %18 = arith.cmpi slt, %14, %17 : vector<64x1xi32>
    %c0_i32_10 = arith.constant 0 : i32
    %19 = arith.cmpi slt, %12, %c0_i32_10 : i32
    %20 = vector.broadcast %19 : i1 to vector<64x1xi1>
    %21 = vector.broadcast %20 : vector<64x1xi1> to vector<64x1xi1>
    %22 = arith.xori %18, %21 : vector<64x1xi1>
    %23 = arith.andi %22, %16 : vector<64x1xi1>
    %24 = vector.broadcast %12 : i32 to vector<64x1xi32>
    %25 = arith.addi %14, %24 : vector<64x1xi32>
    %26 = arith.select %23, %25, %14 : vector<64x1xi1>, vector<64x1xi32>
    %c32_i32 = arith.constant 32 : i32
    %c0_i32_11 = arith.constant 0 : i32
    %27 = arith.cmpi eq, %c32_i32, %c0_i32_11 : i32
    %c1_i32_12 = arith.constant 1 : i32
    %28 = arith.select %27, %c1_i32_12, %c32_i32 : i32
    %29 = vector.broadcast %28 : i32 to vector<64x1xi32>
    %30 = arith.remsi %10, %29 : vector<64x1xi32>
    %c0_i32_13 = arith.constant 0 : i32
    %31 = vector.broadcast %c0_i32_13 : i32 to vector<64x1xi32>
    %32 = arith.cmpi ne, %30, %31 : vector<64x1xi32>
    %c0_i32_14 = arith.constant 0 : i32
    %33 = vector.broadcast %c0_i32_14 : i32 to vector<64x1xi32>
    %34 = arith.cmpi slt, %30, %33 : vector<64x1xi32>
    %c0_i32_15 = arith.constant 0 : i32
    %35 = arith.cmpi slt, %28, %c0_i32_15 : i32
    %36 = vector.broadcast %35 : i1 to vector<64x1xi1>
    %37 = vector.broadcast %36 : vector<64x1xi1> to vector<64x1xi1>
    %38 = arith.xori %34, %37 : vector<64x1xi1>
    %39 = arith.andi %38, %32 : vector<64x1xi1>
    %40 = vector.broadcast %28 : i32 to vector<64x1xi32>
    %41 = arith.addi %30, %40 : vector<64x1xi32>
    %42 = arith.select %39, %41, %30 : vector<64x1xi1>, vector<64x1xi32>
    %cst_16 = arith.constant 0.000000e+00 : f32
    %43 = vector.broadcast %cst_16 : f32 to vector<64x32xf32>
    %c16_i32_17 = arith.constant 16 : i32
    %44 = vector.broadcast %c16_i32_17 : i32 to vector<64x1xi32>
    %45 = arith.cmpi sge, %42, %44 : vector<64x1xi32>
    %c16_i32_18 = arith.constant 16 : i32
    %46 = tpu.dynamic_rotate %9 by %c16_i32_18 dim 0 : vector<64x32xf32>, i32 -> vector<64x32xf32>
    %47 = vector.shape_cast %45 : vector<64x1xi1> to vector<64x1xi1>
    %48 = vector.broadcast %47 : vector<64x1xi1> to vector<64x32xi1>
    %49 = arith.select %48, %46, %43 : vector<64x32xi1>, vector<64x32xf32>
    %c16_i32_19 = arith.constant 16 : i32
    %50 = vector.broadcast %c16_i32_19 : i32 to vector<64x1xi32>
    %51 = arith.cmpi slt, %42, %50 : vector<64x1xi32>
    %c48_i32 = arith.constant 48 : i32
    %52 = tpu.dynamic_rotate %9 by %c48_i32 dim 0 : vector<64x32xf32>, i32 -> vector<64x32xf32>
    %53 = vector.shape_cast %51 : vector<64x1xi1> to vector<64x1xi1>
    %54 = vector.broadcast %53 : vector<64x1xi1> to vector<64x32xi1>
    %55 = arith.select %54, %52, %43 : vector<64x32xi1>, vector<64x32xf32>
    %c1_i32_20 = arith.constant 1 : i32
    %56 = vector.broadcast %c1_i32_20 : i32 to vector<64x1xi32>
    %57 = arith.cmpi sge, %26, %56 : vector<64x1xi32>
    %c1_i32_21 = arith.constant 1 : i32
    %58 = tpu.dynamic_rotate %9 by %c1_i32_21 dim 0 : vector<64x32xf32>, i32 -> vector<64x32xf32>
    %59 = vector.shape_cast %57 : vector<64x1xi1> to vector<64x1xi1>
    %60 = vector.broadcast %59 : vector<64x1xi1> to vector<64x32xi1>
    %61 = arith.select %60, %58, %43 : vector<64x32xi1>, vector<64x32xf32>
    %c14_i32 = arith.constant 14 : i32
    %62 = vector.broadcast %c14_i32 : i32 to vector<64x1xi32>
    %63 = arith.cmpi sle, %26, %62 : vector<64x1xi32>
    %c63_i32 = arith.constant 63 : i32
    %64 = tpu.dynamic_rotate %9 by %c63_i32 dim 0 : vector<64x32xf32>, i32 -> vector<64x32xf32>
    %65 = vector.shape_cast %63 : vector<64x1xi1> to vector<64x1xi1>
    %66 = vector.broadcast %65 : vector<64x1xi1> to vector<64x32xi1>
    %67 = arith.select %66, %64, %43 : vector<64x32xi1>, vector<64x32xf32>
    %68 = tpu.concatenate %9, %49, %55, %61, %67 in 1 : vector<64x32xf32>, vector<64x32xf32>, vector<64x32xf32>, vector<64x32xf32>, vector<64x32xf32> -> vector<64x160xf32>
    %69 = arith.truncf %68 : vector<64x160xf32> to vector<64x160xbf16>
    %c0_22 = arith.constant 0 : index
    %c0_23 = arith.constant 0 : index
    %70 = vector.load %arg4[%c0_22, %c0_23] : memref<160x128xbf16, #tpu.memory_space<vmem>>, vector<160x128xbf16>
    %cst_24 = arith.constant dense<0.000000e+00> : vector<64x128xf32>
    %71 = tpu.matmul %69, %70, %cst_24 {dimension_numbers = #tpu.dot_dimension_numbers<[1], [0], [0], [1], [0, 0, 1, 1], [], []>} : vector<64x160xbf16>, vector<160x128xbf16>, vector<64x128xf32> -> vector<64x128xf32>
    %c0_25 = arith.constant 0 : index
    %c0_26 = arith.constant 0 : index
    %72 = vector.load %arg5[%c0_25, %c0_26] : memref<1x128xf32, #tpu.memory_space<vmem>>, vector<1x128xf32>
    %73 = vector.broadcast %72 : vector<1x128xf32> to vector<64x128xf32>
    %74 = arith.addf %71, %73 : vector<64x128xf32>
    %cst_27 = arith.constant 0.000000e+00 : f32
    %75 = vector.broadcast %cst_27 : f32 to vector<64x128xf32>
    %76 = arith.maximumf %74, %75 : vector<64x128xf32>
    %c0_28 = arith.constant 0 : index
    %c0_29 = arith.constant 0 : index
    %77 = vector.load %arg6[%c0_28, %c0_29] : memref<1x128xf32, #tpu.memory_space<vmem>>, vector<1x128xf32>
    %78 = vector.broadcast %77 : vector<1x128xf32> to vector<64x128xf32>
    %79 = arith.mulf %76, %78 : vector<64x128xf32>
    %c0_30 = arith.constant 0 : index
    %c0_31 = arith.constant 0 : index
    %80 = vector.load %arg7[%c0_30, %c0_31] : memref<1x128xf32, #tpu.memory_space<vmem>>, vector<1x128xf32>
    %81 = vector.broadcast %80 : vector<1x128xf32> to vector<64x128xf32>
    %82 = arith.addf %79, %81 : vector<64x128xf32>
    %83 = arith.addf %1, %82 : vector<64x128xf32>
    %84 = vector.shape_cast %83 : vector<64x128xf32> to vector<2x2x16x128xf32>
    %c0_32 = arith.constant 0 : index
    %c0_33 = arith.constant 0 : index
    %c0_34 = arith.constant 0 : index
    %c0_35 = arith.constant 0 : index
    %85 = vector.load %arg8[%c0_32, %c0_33, %c0_34, %c0_35] : memref<2x2x16x128xf32, #tpu.memory_space<vmem>>, vector<2x2x16x128xf32>
    tpu.vector_store %arg8[%c0_32, %c0_33, %c0_34, %c0_35], %84 {strides = array<i32>} : memref<2x2x16x128xf32, #tpu.memory_space<vmem>>, vector<2x2x16x128xf32>,
    return
  }
  func.func @transform_0(%arg0: i32) -> (i32, i32, i32, i32) {
    %c0_i32 = arith.constant 0 : i32
    %c0_i32_0 = arith.constant 0 : i32
    %c0_i32_1 = arith.constant 0 : i32
    %c0_i32_2 = arith.constant 0 : i32
    return %arg0, %c0_i32, %c0_i32_0, %c0_i32_1 : i32, i32, i32, i32
  }
  func.func @transform_1(%arg0: i32) -> (i32, i32) {
    %c0_i32 = arith.constant 0 : i32
    %c0_i32_0 = arith.constant 0 : i32
    %c0_i32_1 = arith.constant 0 : i32
    return %c0_i32, %c0_i32_0 : i32, i32
  }
  func.func @transform_2(%arg0: i32) -> (i32, i32) {
    %c0_i32 = arith.constant 0 : i32
    %c0_i32_0 = arith.constant 0 : i32
    %c0_i32_1 = arith.constant 0 : i32
    return %c0_i32, %c0_i32_0 : i32, i32
  }
  func.func @transform_3(%arg0: i32) -> (i32, i32) {
    %c0_i32 = arith.constant 0 : i32
    %c0_i32_0 = arith.constant 0 : i32
    %c0_i32_1 = arith.constant 0 : i32
    return %c0_i32, %c0_i32_0 : i32, i32
  }
  func.func @transform_4(%arg0: i32) -> (i32, i32) {
    %c0_i32 = arith.constant 0 : i32
    %c0_i32_0 = arith.constant 0 : i32
    %c0_i32_1 = arith.constant 0 : i32
    return %c0_i32, %c0_i32_0 : i32, i32
  }
  func.func @transform_5(%arg0: i32) -> (i32, i32) {
    %c0_i32 = arith.constant 0 : i32
    %c0_i32_0 = arith.constant 0 : i32
    %c0_i32_1 = arith.constant 0 : i32
    return %c0_i32, %c0_i32_0 : i32, i32
  }
  func.func @transform_6(%arg0: i32) -> (i32, i32) {
    %c0_i32 = arith.constant 0 : i32
    %c0_i32_0 = arith.constant 0 : i32
    %c0_i32_1 = arith.constant 0 : i32
    return %c0_i32, %c0_i32_0 : i32, i32
  }
  func.func @transform_7(%arg0: i32) -> (i32, i32, i32, i32) {
    %c0_i32 = arith.constant 0 : i32
    %c0_i32_0 = arith.constant 0 : i32
    %c0_i32_1 = arith.constant 0 : i32
    %c0_i32_2 = arith.constant 0 : i32
    return %arg0, %c0_i32, %c0_i32_0, %c0_i32_1 : i32, i32, i32, i32
  }
}

</mosaic_0001>

<llo_original>
// kernel: block_b_forward_nhwc.1
$region0: #{block_b_forward_nhwc.1}
  #allocation0 [shape = 'u32[]', space=smem, size = 0x4, offset = 0x4, fixed_abs, tag = 'smem constant byte address 0x4 - core index']
  #allocation1 [shape = 'u32[144,128]{1,0:T(1,128)}', space=vmem, size = 0x12000, scoped, tag = 'internal scratch']
  %s0 = inlined_call_operand.hbm [shape: f32[2,2,16,128], index: 0, kind: input, shape index: {}]
  %s1 = inlined_call_operand.vmem [shape: bf16[128,32], index: 1, kind: input, shape index: {}]
  %s2 = inlined_call_operand.vmem [shape: f32[1,32], index: 2, kind: input, shape index: {}]
  %s3 = inlined_call_operand.vmem [shape: bf16[160,128], index: 3, kind: input, shape index: {}]
  %s4 = inlined_call_operand.vmem [shape: f32[1,128], index: 4, kind: input, shape index: {}]
  %s5 = inlined_call_operand.vmem [shape: f32[1,128], index: 5, kind: input, shape index: {}]
  %s6 = inlined_call_operand.vmem [shape: f32[1,128], index: 6, kind: input, shape index: {}]
  %s7 = inlined_call_operand.hbm [shape: f32[2,2,16,128], index: 7, kind: output, shape index: {}]
  %s8 = sld [smem:[#allocation0]]
  $region42: #{block_b_forward_nhwc.1} parent=0
    _
  %s10 = ssub.s32 1, %s8
  %s11 = scalar_select 0, %s10, %s8
  $region1: #{block_b_forward_nhwc.1} parent=0
    #allocation2 [shape = 'u8[32768]{0}', space=vmem, size = 0x8000, scoped, tag = 'input window, operand 0, single buffered']
    #allocation3 [shape = 's32[1]{0}', space=sflag, size = 0x4, scoped, tag = 'scoped memory for block_b_forward_nhwc.1']
    #allocation4 [shape = 's32[1]{0}', space=sflag, size = 0x4, scoped, tag = 'scoped memory for block_b_forward_nhwc.1']
    #allocation5 [shape = 'u8[32768]{0}', space=vmem, size = 0x8000, scoped, tag = 'output window, operand 0, single buffered']
    %12 = vsyncpa [#allocation3], 0
    %13 = vsyncpa [#allocation4], 0
    // Predicated region
    $region2: #{block_b_forward_nhwc.1} parent=1 // pred_check
      _
    $region3: #{block_b_forward_nhwc.1} parent=1 // pred_check_branch
      %15 = sbr.rel (0) target = $region5
    $region4: #{block_b_forward_nhwc.1} parent=1 // pred_region
      %s17 = ssub.s32 1024, 1024
      %18 = vsyncadd [#allocation3], %s17
      %s19 = sshll.u32 [#allocation2], 4
      %s20 = int_to_ptr.vmem [resolvable:$true] %s19
      %25 = dma.hbm_to_vmem [thread:$0]  %s0, 1024, %s20, [#allocation3], 128, 128, 8
    $region5: #{block_b_forward_nhwc.1} parent=1 // pred_fallthru
      _
    // Predicated region
    $region6: #{block_b_forward_nhwc.1} parent=1 // pred_check
      _
    $region7: #{block_b_forward_nhwc.1} parent=1 // pred_check_branch
      %27 = sbr.rel (0) target = $region9
    $region8: #{block_b_forward_nhwc.1} parent=1 // pred_region
      _
    $region9: #{block_b_forward_nhwc.1} parent=1 // pred_fallthru
      _
    // Predicated region
    $region10: #{block_b_forward_nhwc.1} parent=1 // pred_check
      _
    $region11: #{block_b_forward_nhwc.1} parent=1 // pred_check_branch
      %29 = sbr.rel (0) target = $region13
    $region12: #{block_b_forward_nhwc.1} parent=1 // pred_region
      _
    $region13: #{block_b_forward_nhwc.1} parent=1 // pred_fallthru
      _
    // Predicated region
    $region14: #{block_b_forward_nhwc.1} parent=1 // pred_check
      _
    $region15: #{block_b_forward_nhwc.1} parent=1 // pred_check_branch
      %31 = sbr.rel (0) target = $region17
    $region16: #{block_b_forward_nhwc.1} parent=1 // pred_region
      _
    $region17: #{block_b_forward_nhwc.1} parent=1 // pred_fallthru
      _
    // Predicated region
    $region18: #{block_b_forward_nhwc.1} parent=1 // pred_check
      _
    $region19: #{block_b_forward_nhwc.1} parent=1 // pred_check_branch
      %33 = sbr.rel (0) target = $region21
    $region20: #{block_b_forward_nhwc.1} parent=1 // pred_region
      _
    $region21: #{block_b_forward_nhwc.1} parent=1 // pred_fallthru
      _
    // Predicated region
    $region22: #{block_b_forward_nhwc.1} parent=1 // pred_check
      _
    $region23: #{block_b_forward_nhwc.1} parent=1 // pred_check_branch
      %35 = sbr.rel (0) target = $region25
    $region24: #{block_b_forward_nhwc.1} parent=1 // pred_region
      _
    $region25: #{block_b_forward_nhwc.1} parent=1 // pred_fallthru
      _
    // Predicated region
    $region26: #{block_b_forward_nhwc.1} parent=1 // pred_check
      _
    $region27: #{block_b_forward_nhwc.1} parent=1 // pred_check_branch
      %37 = sbr.rel (0) target = $region29
    $region28: #{block_b_forward_nhwc.1} parent=1 // pred_region
      _
    $region29: #{block_b_forward_nhwc.1} parent=1 // pred_fallthru
      _
    // Predicated region
    $region30: #{block_b_forward_nhwc.1} parent=1 // pred_check
      _
    $region31: #{block_b_forward_nhwc.1} parent=1 // pred_check_branch
      %39 = sbr.rel (0) target = $region33
    $region32: #{block_b_forward_nhwc.1} parent=1 // pred_region
      %40 = dma.done [#allocation3], 1024
    $region33: #{block_b_forward_nhwc.1} parent=1 // pred_fallthru
      _
    %v42 = vld [vmem:[#allocation2] sm:$0xff]
    %v43 = vld [vmem:[#allocation2 + $0x8] sm:$0xff]
    %v44 = vld [vmem:[#allocation2 + $0x10] sm:$0xff]
    %v45 = vld [vmem:[#allocation2 + $0x18] sm:$0xff]
    %v46 = vld [vmem:[#allocation2 + $0x20] sm:$0xff]
    %v47 = vld [vmem:[#allocation2 + $0x28] sm:$0xff]
    %v48 = vld [vmem:[#allocation2 + $0x30] sm:$0xff]
    %v49 = vld [vmem:[#allocation2 + $0x38] sm:$0xff]
    %v50 = vpack.c.bf16 %v43, %v42
    %v51 = vpack.c.bf16 %v45, %v44
    %v52 = vpack.c.bf16 %v47, %v46
    %v53 = vpack.c.bf16 %v49, %v48
    %v54 = vld [vmem:[%s1] sm:$0xf]
    %v55 = vld [vmem:[%s1 + $0x4] sm:$0xf]
    %v56 = vld [vmem:[%s1 + $0x8] sm:$0xf]
    %v57 = vld [vmem:[%s1 + $0xc] sm:$0xf]
    %v58 = vld [vmem:[%s1 + $0x10] sm:$0xf]
    %v59 = vld [vmem:[%s1 + $0x14] sm:$0xf]
    %v60 = vld [vmem:[%s1 + $0x18] sm:$0xf]
    %v61 = vld [vmem:[%s1 + $0x1c] sm:$0xf]
    %v62 = vld [vmem:[%s1 + $0x20] sm:$0xf]
    %v63 = vld [vmem:[%s1 + $0x24] sm:$0xf]
    %v64 = vld [vmem:[%s1 + $0x28] sm:$0xf]
    %v65 = vld [vmem:[%s1 + $0x2c] sm:$0xf]
    %v66 = vld [vmem:[%s1 + $0x30] sm:$0xf]
    %v67 = vld [vmem:[%s1 + $0x34] sm:$0xf]
    %v68 = vld [vmem:[%s1 + $0x38] sm:$0xf]
    %v69 = vld [vmem:[%s1 + $0x3c] sm:$0xf]
    %v70 = vld [vmem:[%s2] sm:$0x1]
    %v72 = vlaneseq
    %v73 = vshrl.u32 %v72, 7
    %v74 = vsub.s32 0, %v73
    %v75 = vrot.slane %v70, %v74
    %v93 = vunpack.c.l.b16 %v54
    %v94 = vunpack.c.l.b16 %v55
    %v95 = vunpack.c.l.b16 %v56
    %v96 = vunpack.c.l.b16 %v57
    %v97 = vunpack.c.l.b16 %v58
    %v98 = vunpack.c.l.b16 %v59
    %v99 = vunpack.c.l.b16 %v60
    %v100 = vunpack.c.l.b16 %v61
    %v101 = vunpack.c.l.b16 %v62
    %v102 = vunpack.c.l.b16 %v63
    %v103 = vunpack.c.l.b16 %v64
    %v104 = vunpack.c.l.b16 %v65
    %v105 = vunpack.c.l.b16 %v66
    %v106 = vunpack.c.l.b16 %v67
    %v107 = vunpack.c.l.b16 %v68
    %v108 = vunpack.c.l.b16 %v69
    %v109 = vpack.c.b16 %v94, %v93
    %v110 = vpack.c.b16 %v96, %v95
    %v111 = vpack.c.b16 %v98, %v97
    %v112 = vpack.c.b16 %v100, %v99
    %v113 = vpack.c.b16 %v102, %v101
    %v114 = vpack.c.b16 %v104, %v103
    %v115 = vpack.c.b16 %v106, %v105
    %v116 = vpack.c.b16 %v108, %v107
    %125 = vmatprep.subr.bf16.mxu0 0
    %126 = vmatpush1.bf16.msra.mxu0 %v116
    %127 = vmatprep.subr.bf16.mxu0 0
    %128 = vmatpush1.bf16.msra.mxu0 %v115
    %129 = vmatprep.subr.bf16.mxu0 0
    %130 = vmatpush1.bf16.msra.mxu0 %v114
    %131 = vmatprep.subr.bf16.mxu0 0
    %132 = vmatpush1.bf16.msra.mxu0 %v113
    %133 = vmatprep.subr.bf16.mxu0 0
    %134 = vmatpush1.bf16.msra.mxu0 %v112
    %135 = vmatprep.subr.bf16.mxu0 0
    %136 = vmatpush1.bf16.msra.mxu0 %v111
    %137 = vmatprep.subr.bf16.mxu0 0
    %138 = vmatpush1.bf16.msra.mxu0 %v110
    %139 = vmatprep.subr.bf16.mxu0 0
    %140 = vmatpush1.bf16.msra.mxu0 %v109
    %141 = vmatprep.subr.bf16.mxu0 0
    %142 = vmatpush2.bf16.msra.mxu0 0
    %143 = vmatprep.subr.bf16.mxu0 0
    %144 = vmatpush2.bf16.msra.mxu0 0
    %145 = vmatprep.subr.bf16.mxu0 0
    %146 = vmatpush2.bf16.msra.mxu0 0
    %147 = vmatprep.subr.bf16.mxu0 0
    %148 = vmatpush2.bf16.msra.mxu0 0
    %149 = vmatprep.subr.bf16.mxu0 0
    %150 = vmatpush2.bf16.msra.mxu0 0
    %151 = vmatprep.subr.bf16.mxu0 0
    %152 = vmatpush2.bf16.msra.mxu0 0
    %153 = vmatprep.subr.bf16.mxu0 0
    %154 = vmatpush2.bf16.msra.mxu0 0
    %155 = vmatprep.subr.bf16.mxu0 0
    %156 = vmatpush2.bf16.msra.mxu0 0
    %157 = vmatprep.mubr.bf16.mxu0 0
    %158 = vmatmul.mubr.bf16.gmra.mxu0 %v50
    %v159 = vpop.f32.mrf.mxu0
    %v160 = vadd.f32 %v75, %v159
    %v161 = vpop.f32.mrf.mxu0
    %v162 = vpop.f32.mrf.mxu0
    %v163 = vadd.f32 %v75, %v162
    %v164 = vpop.f32.mrf.mxu0
    %165 = vmatprep.mubr.bf16.mxu0 0
    %166 = vmatmul.mubr.bf16.gmra.mxu0 %v51
    %v167 = vpop.f32.mrf.mxu0
    %v168 = vadd.f32 %v75, %v167
    %v169 = vpop.f32.mrf.mxu0
    %v170 = vpop.f32.mrf.mxu0
    %v171 = vadd.f32 %v75, %v170
    %v172 = vpop.f32.mrf.mxu0
    %173 = vmatprep.mubr.bf16.mxu0 0
    %174 = vmatmul.mubr.bf16.gmra.mxu0 %v52
    %v175 = vpop.f32.mrf.mxu0
    %v176 = vadd.f32 %v75, %v175
    %v177 = vpop.f32.mrf.mxu0
    %v178 = vpop.f32.mrf.mxu0
    %v179 = vadd.f32 %v75, %v178
    %v180 = vpop.f32.mrf.mxu0
    %181 = vmatprep.mubr.bf16.mxu0 0
    %182 = vmatmul.mubr.bf16.gmra.mxu0 %v53
    %v183 = vpop.f32.mrf.mxu0
    %v184 = vadd.f32 %v75, %v183
    %v185 = vpop.f32.mrf.mxu0
    %v186 = vpop.f32.mrf.mxu0
    %v187 = vadd.f32 %v75, %v186
    %v188 = vpop.f32.mrf.mxu0
    %189 = vdwg.mxu0
    %v190 = vmax.f32 %v160, 0.0
    %v191 = vmax.f32 %v163, 0.0
    %v192 = vmax.f32 %v168, 0.0
    %v193 = vmax.f32 %v171, 0.0
    %v194 = vmax.f32 %v176, 0.0
    %v195 = vmax.f32 %v179, 0.0
    %v196 = vmax.f32 %v184, 0.0
    %v197 = vmax.f32 %v187, 0.0
    %v198 = vlaneseq
    %v199 = vshrl.u32 %v198, 7
    %v200 = vadd.s32 %v199, 8
    %v201 = vadd.s32 %v199, 16
    %v202 = vadd.s32 %v199, 24
    %v203 = vadd.s32 %v199, 32
    %v204 = vadd.s32 %v199, 40
    %v205 = vadd.s32 %v199, 48
    %v206 = vadd.s32 %v199, 56
    %vm207 = vcmp.lt.s32.totalorder %v199, 0
    %v208 = vsub.s32 0, %v199
    %v209 = vsel %vm207, %v208, %v199
    %v210 = vshrl.u32 %v209, 4
    %v211 = vand.u32 %v209, 15
    %v212 = vsub.s32 0, %v211
    %v213 = vsel %vm207, %v212, %v211
    %vm214 = vcmp.lt.s32.totalorder %v200, 0
    %v215 = vsub.s32 0, %v200
    %v216 = vsel %vm214, %v215, %v200
    %v217 = vshrl.u32 %v216, 4
    %v218 = vand.u32 %v216, 15
    %v219 = vsub.s32 0, %v218
    %v220 = vsel %vm214, %v219, %v218
    %vm221 = vcmp.lt.s32.totalorder %v201, 0
    %v222 = vsub.s32 0, %v201
    %v223 = vsel %vm221, %v222, %v201
    %v224 = vshrl.u32 %v223, 4
    %v225 = vand.u32 %v223, 15
    %v226 = vsub.s32 0, %v225
    %v227 = vsel %vm221, %v226, %v225
    %vm228 = vcmp.lt.s32.totalorder %v202, 0
    %v229 = vsub.s32 0, %v202
    %v230 = vsel %vm228, %v229, %v202
    %v231 = vshrl.u32 %v230, 4
    %v232 = vand.u32 %v230, 15
    %v233 = vsub.s32 0, %v232
    %v234 = vsel %vm228, %v233, %v232
    %vm235 = vcmp.lt.s32.totalorder %v203, 0
    %v236 = vsub.s32 0, %v203
    %v237 = vsel %vm235, %v236, %v203
    %v238 = vshrl.u32 %v237, 4
    %v239 = vand.u32 %v237, 15
    %v240 = vsub.s32 0, %v239
    %v241 = vsel %vm235, %v240, %v239
    %vm242 = vcmp.lt.s32.totalorder %v204, 0
    %v243 = vsub.s32 0, %v204
    %v244 = vsel %vm242, %v243, %v204
    %v245 = vshrl.u32 %v244, 4
    %v246 = vand.u32 %v244, 15
    %v247 = vsub.s32 0, %v246
    %v248 = vsel %vm242, %v247, %v246
    %vm249 = vcmp.lt.s32.totalorder %v205, 0
    %v250 = vsub.s32 0, %v205
    %v251 = vsel %vm249, %v250, %v205
    %v252 = vshrl.u32 %v251, 4
    %v253 = vand.u32 %v251, 15
    %v254 = vsub.s32 0, %v253
    %v255 = vsel %vm249, %v254, %v253
    %vm256 = vcmp.lt.s32.totalorder %v206, 0
    %v257 = vsub.s32 0, %v206
    %v258 = vsel %vm256, %v257, %v206
    %v259 = vshrl.u32 %v258, 4
    %v260 = vand.u32 %v258, 15
    %v261 = vsub.s32 0, %v260
    %v262 = vsel %vm256, %v261, %v260
    %vm263 = vcmp.ne.s32.totalorder %v213, 0
    %vm264 = vcmp.ne.s32.totalorder %v220, 0
    %vm265 = vcmp.ne.s32.totalorder %v227, 0
    %vm266 = vcmp.ne.s32.totalorder %v234, 0
    %vm267 = vcmp.ne.s32.totalorder %v241, 0
    %vm268 = vcmp.ne.s32.totalorder %v248, 0
    %vm269 = vcmp.ne.s32.totalorder %v255, 0
    %vm270 = vcmp.ne.s32.totalorder %v262, 0
    %vm271 = vcmp.lt.s32.totalorder %v213, 0
    %vm272 = vcmp.lt.s32.totalorder %v220, 0
    %vm273 = vcmp.lt.s32.totalorder %v227, 0
    %vm274 = vcmp.lt.s32.totalorder %v234, 0
    %vm275 = vcmp.lt.s32.totalorder %v241, 0
    %vm276 = vcmp.lt.s32.totalorder %v248, 0
    %vm277 = vcmp.lt.s32.totalorder %v255, 0
    %vm278 = vcmp.lt.s32.totalorder %v262, 0
    %vm279 = vmand %vm271, %vm263
    %vm280 = vmand %vm272, %vm264
    %vm281 = vmand %vm273, %vm265
    %vm282 = vmand %vm274, %vm266
    %vm283 = vmand %vm275, %vm267
    %vm284 = vmand %vm276, %vm268
    %vm285 = vmand %vm277, %vm269
    %vm286 = vmand %vm278, %vm270
    %v287 = vadd.s32 %v213, 16
    %v288 = vadd.s32 %v220, 16
    %v289 = vadd.s32 %v227, 16
    %v290 = vadd.s32 %v234, 16
    %v291 = vadd.s32 %v241, 16
    %v292 = vadd.s32 %v248, 16
    %v293 = vadd.s32 %v255, 16
    %v294 = vadd.s32 %v262, 16
    %v295 = vsel %vm279, %v287, %v213
    %v296 = vsel %vm280, %v288, %v220
    %v297 = vsel %vm281, %v289, %v227
    %v298 = vsel %vm282, %v290, %v234
    %v299 = vsel %vm283, %v291, %v241
    %v300 = vsel %vm284, %v292, %v248
    %v301 = vsel %vm285, %v293, %v255
    %v302 = vsel %vm286, %v294, %v262
    %vm303 = vcmp.lt.s32.totalorder %v199, 0
    %v304 = vsub.s32 0, %v199
    %v305 = vsel %vm303, %v304, %v199
    %v306 = vshrl.u32 %v305, 5
    %v307 = vand.u32 %v305, 31
    %v308 = vsub.s32 0, %v307
    %v309 = vsel %vm303, %v308, %v307
    %vm310 = vcmp.lt.s32.totalorder %v200, 0
    %v311 = vsub.s32 0, %v200
    %v312 = vsel %vm310, %v311, %v200
    %v313 = vshrl.u32 %v312, 5
    %v314 = vand.u32 %v312, 31
    %v315 = vsub.s32 0, %v314
    %v316 = vsel %vm310, %v315, %v314
    %vm317 = vcmp.lt.s32.totalorder %v201, 0
    %v318 = vsub.s32 0, %v201
    %v319 = vsel %vm317, %v318, %v201
    %v320 = vshrl.u32 %v319, 5
    %v321 = vand.u32 %v319, 31
    %v322 = vsub.s32 0, %v321
    %v323 = vsel %vm317, %v322, %v321
    %vm324 = vcmp.lt.s32.totalorder %v202, 0
    %v325 = vsub.s32 0, %v202
    %v326 = vsel %vm324, %v325, %v202
    %v327 = vshrl.u32 %v326, 5
    %v328 = vand.u32 %v326, 31
    %v329 = vsub.s32 0, %v328
    %v330 = vsel %vm324, %v329, %v328
    %vm331 = vcmp.lt.s32.totalorder %v203, 0
    %v332 = vsub.s32 0, %v203
    %v333 = vsel %vm331, %v332, %v203
    %v334 = vshrl.u32 %v333, 5
    %v335 = vand.u32 %v333, 31
    %v336 = vsub.s32 0, %v335
    %v337 = vsel %vm331, %v336, %v335
    %vm338 = vcmp.lt.s32.totalorder %v204, 0
    %v339 = vsub.s32 0, %v204
    %v340 = vsel %vm338, %v339, %v204
    %v341 = vshrl.u32 %v340, 5
    %v342 = vand.u32 %v340, 31
    %v343 = vsub.s32 0, %v342
    %v344 = vsel %vm338, %v343, %v342
    %vm345 = vcmp.lt.s32.totalorder %v205, 0
    %v346 = vsub.s32 0, %v205
    %v347 = vsel %vm345, %v346, %v205
    %v348 = vshrl.u32 %v347, 5
    %v349 = vand.u32 %v347, 31
    %v350 = vsub.s32 0, %v349
    %v351 = vsel %vm345, %v350, %v349
    %vm352 = vcmp.lt.s32.totalorder %v206, 0
    %v353 = vsub.s32 0, %v206
    %v354 = vsel %vm352, %v353, %v206
    %v355 = vshrl.u32 %v354, 5
    %v356 = vand.u32 %v354, 31
    %v357 = vsub.s32 0, %v356
    %v358 = vsel %vm352, %v357, %v356
    %vm359 = vcmp.ne.s32.totalorder %v309, 0
    %vm360 = vcmp.ne.s32.totalorder %v316, 0
    %vm361 = vcmp.ne.s32.totalorder %v323, 0
    %vm362 = vcmp.ne.s32.totalorder %v330, 0
    %vm363 = vcmp.ne.s32.totalorder %v337, 0
    %vm364 = vcmp.ne.s32.totalorder %v344, 0
    %vm365 = vcmp.ne.s32.totalorder %v351, 0
    %vm366 = vcmp.ne.s32.totalorder %v358, 0
    %vm367 = vcmp.lt.s32.totalorder %v309, 0
    %vm368 = vcmp.lt.s32.totalorder %v316, 0
    %vm369 = vcmp.lt.s32.totalorder %v323, 0
    %vm370 = vcmp.lt.s32.totalorder %v330, 0
    %vm371 = vcmp.lt.s32.totalorder %v337, 0
    %vm372 = vcmp.lt.s32.totalorder %v344, 0
    %vm373 = vcmp.lt.s32.totalorder %v351, 0
    %vm374 = vcmp.lt.s32.totalorder %v358, 0
    %vm375 = vmand %vm367, %vm359
    %vm376 = vmand %vm368, %vm360
    %vm377 = vmand %vm369, %vm361
    %vm378 = vmand %vm370, %vm362
    %vm379 = vmand %vm371, %vm363
    %vm380 = vmand %vm372, %vm364
    %vm381 = vmand %vm373, %vm365
    %vm382 = vmand %vm374, %vm366
    %v383 = vadd.s32 %v309, 32
    %v384 = vadd.s32 %v316, 32
    %v385 = vadd.s32 %v323, 32
    %v386 = vadd.s32 %v330, 32
    %v387 = vadd.s32 %v337, 32
    %v388 = vadd.s32 %v344, 32
    %v389 = vadd.s32 %v351, 32
    %v390 = vadd.s32 %v358, 32
    %v391 = vsel %vm375, %v383, %v309
    %v392 = vsel %vm376, %v384, %v316
    %v393 = vsel %vm377, %v385, %v323
    %v394 = vsel %vm378, %v386, %v330
    %v395 = vsel %vm379, %v387, %v337
    %v396 = vsel %vm380, %v388, %v344
    %v397 = vsel %vm381, %v389, %v351
    %v398 = vsel %vm382, %v390, %v358
    %vm399 = vcmp.ge.s32.totalorder %v391, 16
    %vm400 = vcmp.ge.s32.totalorder %v392, 16
    %vm401 = vcmp.ge.s32.totalorder %v393, 16
    %vm402 = vcmp.ge.s32.totalorder %v394, 16
    %vm403 = vcmp.ge.s32.totalorder %v395, 16
    %vm404 = vcmp.ge.s32.totalorder %v396, 16
    %vm405 = vcmp.ge.s32.totalorder %v397, 16
    %vm406 = vcmp.ge.s32.totalorder %v398, 16
    %v407 = vsel %vm399, 1, 0
    %v408 = vsel %vm400, 1, 0
    %v409 = vsel %vm401, 1, 0
    %v410 = vsel %vm402, 1, 0
    %v411 = vsel %vm403, 1, 0
    %v412 = vsel %vm404, 1, 0
    %v413 = vsel %vm405, 1, 0
    %v414 = vsel %vm406, 1, 0
    %vm415 = vcmp.eq.s32.totalorder %v407, 1
    %vm416 = vcmp.eq.s32.totalorder %v408, 1
    %vm417 = vcmp.eq.s32.totalorder %v409, 1
    %vm418 = vcmp.eq.s32.totalorder %v410, 1
    %vm419 = vcmp.eq.s32.totalorder %v411, 1
    %vm420 = vcmp.eq.s32.totalorder %v412, 1
    %vm421 = vcmp.eq.s32.totalorder %v413, 1
    %vm422 = vcmp.eq.s32.totalorder %v414, 1
    %v423 = vsel %vm415, %v196, 0.0
    %v424 = vsel %vm416, %v197, 0.0
    %v425 = vsel %vm417, %v190, 0.0
    %v426 = vsel %vm418, %v191, 0.0
    %v427 = vsel %vm419, %v192, 0.0
    %v428 = vsel %vm420, %v193, 0.0
    %v429 = vsel %vm421, %v194, 0.0
    %v430 = vsel %vm422, %v195, 0.0
    %vm431 = vcmp.lt.s32.totalorder %v391, 16
    %vm432 = vcmp.lt.s32.totalorder %v392, 16
    %vm433 = vcmp.lt.s32.totalorder %v393, 16
    %vm434 = vcmp.lt.s32.totalorder %v394, 16
    %vm435 = vcmp.lt.s32.totalorder %v395, 16
    %vm436 = vcmp.lt.s32.totalorder %v396, 16
    %vm437 = vcmp.lt.s32.totalorder %v397, 16
    %vm438 = vcmp.lt.s32.totalorder %v398, 16
    %v439 = vsel %vm431, 1, 0
    %v440 = vsel %vm432, 1, 0
    %v441 = vsel %vm433, 1, 0
    %v442 = vsel %vm434, 1, 0
    %v443 = vsel %vm435, 1, 0
    %v444 = vsel %vm436, 1, 0
    %v445 = vsel %vm437, 1, 0
    %v446 = vsel %vm438, 1, 0
    %vm447 = vcmp.eq.s32.totalorder %v439, 1
    %vm448 = vcmp.eq.s32.totalorder %v440, 1
    %vm449 = vcmp.eq.s32.totalorder %v441, 1
    %vm450 = vcmp.eq.s32.totalorder %v442, 1
    %vm451 = vcmp.eq.s32.totalorder %v443, 1
    %vm452 = vcmp.eq.s32.totalorder %v444, 1
    %vm453 = vcmp.eq.s32.totalorder %v445, 1
    %vm454 = vcmp.eq.s32.totalorder %v446, 1
    %v455 = vsel %vm447, %v192, 0.0
    %v456 = vsel %vm448, %v193, 0.0
    %v457 = vsel %vm449, %v194, 0.0
    %v458 = vsel %vm450, %v195, 0.0
    %v459 = vsel %vm451, %v196, 0.0
    %v460 = vsel %vm452, %v197, 0.0
    %v461 = vsel %vm453, %v190, 0.0
    %v462 = vsel %vm454, %v191, 0.0
    %vm463 = vcmp.ge.s32.totalorder %v295, 1
    %vm464 = vcmp.ge.s32.totalorder %v296, 1
    %vm465 = vcmp.ge.s32.totalorder %v297, 1
    %vm466 = vcmp.ge.s32.totalorder %v298, 1
    %vm467 = vcmp.ge.s32.totalorder %v299, 1
    %vm468 = vcmp.ge.s32.totalorder %v300, 1
    %vm469 = vcmp.ge.s32.totalorder %v301, 1
    %vm470 = vcmp.ge.s32.totalorder %v302, 1
    %v471 = vrot.slane %v190, 7
    %v472 = vrot.slane %v191, 7
    %v473 = vrot.slane %v192, 7
    %v474 = vrot.slane %v193, 7
    %v475 = vrot.slane %v194, 7
    %v476 = vrot.slane %v195, 7
    %v477 = vrot.slane %v196, 7
    %v478 = vrot.slane %v197, 7
    %vm479 = vcmp.lt.s32.totalorder %v199, 1
    %v480 = vsel %vm479, %v477, %v478
    %v481 = vsel %vm479, %v476, %v477
    %v482 = vsel %vm479, %v475, %v476
    %v483 = vsel %vm479, %v474, %v475
    %v484 = vsel %vm479, %v473, %v474
    %v485 = vsel %vm479, %v472, %v473
    %v486 = vsel %vm479, %v471, %v472
    %v487 = vsel %vm479, %v478, %v471
    %v488 = vsel %vm463, 1, 0
    %v489 = vsel %vm464, 1, 0
    %v490 = vsel %vm465, 1, 0
    %v491 = vsel %vm466, 1, 0
    %v492 = vsel %vm467, 1, 0
    %v493 = vsel %vm468, 1, 0
    %v494 = vsel %vm469, 1, 0
    %v495 = vsel %vm470, 1, 0
    %vm496 = vcmp.eq.s32.totalorder %v488, 1
    %vm497 = vcmp.eq.s32.totalorder %v489, 1
    %vm498 = vcmp.eq.s32.totalorder %v490, 1
    %vm499 = vcmp.eq.s32.totalorder %v491, 1
    %vm500 = vcmp.eq.s32.totalorder %v492, 1
    %vm501 = vcmp.eq.s32.totalorder %v493, 1
    %vm502 = vcmp.eq.s32.totalorder %v494, 1
    %vm503 = vcmp.eq.s32.totalorder %v495, 1
    %v504 = vsel %vm496, %v487, 0.0
    %v505 = vsel %vm497, %v486, 0.0
    %v506 = vsel %vm498, %v485, 0.0
    %v507 = vsel %vm499, %v484, 0.0
    %v508 = vsel %vm500, %v483, 0.0
    %v509 = vsel %vm501, %v482, 0.0
    %v510 = vsel %vm502, %v481, 0.0
    %v511 = vsel %vm503, %v480, 0.0
    %vm512 = vcmp.le.s32.totalorder %v295, 14
    %vm513 = vcmp.le.s32.totalorder %v296, 14
    %vm514 = vcmp.le.s32.totalorder %v297, 14
    %vm515 = vcmp.le.s32.totalorder %v298, 14
    %vm516 = vcmp.le.s32.totalorder %v299, 14
    %vm517 = vcmp.le.s32.totalorder %v300, 14
    %vm518 = vcmp.le.s32.totalorder %v301, 14
    %vm519 = vcmp.le.s32.totalorder %v302, 14
    %v520 = vrot.slane %v190, 1
    %v521 = vrot.slane %v191, 1
    %v522 = vrot.slane %v192, 1
    %v523 = vrot.slane %v193, 1
    %v524 = vrot.slane %v194, 1
    %v525 = vrot.slane %v195, 1
    %v526 = vrot.slane %v196, 1
    %v527 = vrot.slane %v197, 1
    %vm528 = vcmp.lt.s32.totalorder %v199, 7
    %v529 = vsel %vm528, %v526, %v527
    %v530 = vsel %vm528, %v525, %v526
    %v531 = vsel %vm528, %v524, %v525
    %v532 = vsel %vm528, %v523, %v524
    %v533 = vsel %vm528, %v522, %v523
    %v534 = vsel %vm528, %v521, %v522
    %v535 = vsel %vm528, %v520, %v521
    %v536 = vsel %vm528, %v527, %v520
    %v537 = vsel %vm512, 1, 0
    %v538 = vsel %vm513, 1, 0
    %v539 = vsel %vm514, 1, 0
    %v540 = vsel %vm515, 1, 0
    %v541 = vsel %vm516, 1, 0
    %v542 = vsel %vm517, 1, 0
    %v543 = vsel %vm518, 1, 0
    %v544 = vsel %vm519, 1, 0
    %vm545 = vcmp.eq.s32.totalorder %v537, 1
    %vm546 = vcmp.eq.s32.totalorder %v538, 1
    %vm547 = vcmp.eq.s32.totalorder %v539, 1
    %vm548 = vcmp.eq.s32.totalorder %v540, 1
    %vm549 = vcmp.eq.s32.totalorder %v541, 1
    %vm550 = vcmp.eq.s32.totalorder %v542, 1
    %vm551 = vcmp.eq.s32.totalorder %v543, 1
    %vm552 = vcmp.eq.s32.totalorder %v544, 1
    %v553 = vsel %vm545, %v535, 0.0
    %v554 = vsel %vm546, %v534, 0.0
    %v555 = vsel %vm547, %v533, 0.0
    %v556 = vsel %vm548, %v532, 0.0
    %v557 = vsel %vm549, %v531, 0.0
    %v558 = vsel %vm550, %v530, 0.0
    %v559 = vsel %vm551, %v529, 0.0
    %v560 = vsel %vm552, %v536, 0.0
    %569 = vrot.lane.b32.xlu0 %v423, 32
    %v570 = vpop.permute.xlu0 %569
    %571 = vrot.lane.b32.xlu0 %v424, 32
    %v572 = vpop.permute.xlu0 %571
    %573 = vrot.lane.b32.xlu0 %v425, 32
    %v574 = vpop.permute.xlu0 %573
    %575 = vrot.lane.b32.xlu0 %v426, 32
    %v576 = vpop.permute.xlu0 %575
    %577 = vrot.lane.b32.xlu0 %v427, 32
    %v578 = vpop.permute.xlu0 %577
    %579 = vrot.lane.b32.xlu0 %v428, 32
    %v580 = vpop.permute.xlu0 %579
    %581 = vrot.lane.b32.xlu0 %v429, 32
    %v582 = vpop.permute.xlu0 %581
    %583 = vrot.lane.b32.xlu0 %v430, 32
    %v584 = vpop.permute.xlu0 %583
    %601 = vrot.lane.b32.xlu0 %v455, 64
    %v602 = vpop.permute.xlu0 %601
    %603 = vrot.lane.b32.xlu0 %v456, 64
    %v604 = vpop.permute.xlu0 %603
    %605 = vrot.lane.b32.xlu0 %v457, 64
    %v606 = vpop.permute.xlu0 %605
    %607 = vrot.lane.b32.xlu0 %v458, 64
    %v608 = vpop.permute.xlu0 %607
    %609 = vrot.lane.b32.xlu0 %v459, 64
    %v610 = vpop.permute.xlu0 %609
    %611 = vrot.lane.b32.xlu0 %v460, 64
    %v612 = vpop.permute.xlu0 %611
    %613 = vrot.lane.b32.xlu0 %v461, 64
    %v614 = vpop.permute.xlu0 %613
    %615 = vrot.lane.b32.xlu0 %v462, 64
    %v616 = vpop.permute.xlu0 %615
    %633 = vrot.lane.b32.xlu0 %v504, 96
    %v634 = vpop.permute.xlu0 %633
    %635 = vrot.lane.b32.xlu0 %v505, 96
    %v636 = vpop.permute.xlu0 %635
    %637 = vrot.lane.b32.xlu0 %v506, 96
    %v638 = vpop.permute.xlu0 %637
    %639 = vrot.lane.b32.xlu0 %v507, 96
    %v640 = vpop.permute.xlu0 %639
    %641 = vrot.lane.b32.xlu0 %v508, 96
    %v642 = vpop.permute.xlu0 %641
    %643 = vrot.lane.b32.xlu0 %v509, 96
    %v644 = vpop.permute.xlu0 %643
    %645 = vrot.lane.b32.xlu0 %v510, 96
    %v646 = vpop.permute.xlu0 %645
    %647 = vrot.lane.b32.xlu0 %v511, 96
    %v648 = vpop.permute.xlu0 %647
    %vm657 = vcmask 261120
    %v658 = vsel %vm657, %v190, %v570
    %v659 = vsel %vm657, %v191, %v572
    %v660 = vsel %vm657, %v192, %v574
    %v661 = vsel %vm657, %v193, %v576
    %v662 = vsel %vm657, %v194, %v578
    %v663 = vsel %vm657, %v195, %v580
    %v664 = vsel %vm657, %v196, %v582
    %v665 = vsel %vm657, %v197, %v584
    %vm666 = vcmask 523264
    %v667 = vsel %vm666, %v658, %v602
    %v668 = vsel %vm666, %v659, %v604
    %v669 = vsel %vm666, %v660, %v606
    %v670 = vsel %vm666, %v661, %v608
    %v671 = vsel %vm666, %v662, %v610
    %v672 = vsel %vm666, %v663, %v612
    %v673 = vsel %vm666, %v664, %v614
    %v674 = vsel %vm666, %v665, %v616
    %vm675 = vcmask 785408
    %v676 = vsel %vm675, %v667, %v634
    %v677 = vsel %vm675, %v668, %v636
    %v678 = vsel %vm675, %v669, %v638
    %v679 = vsel %vm675, %v670, %v640
    %v680 = vsel %vm675, %v671, %v642
    %v681 = vsel %vm675, %v672, %v644
    %v682 = vsel %vm675, %v673, %v646
    %v683 = vsel %vm675, %v674, %v648
    %v684 = vpack.c.bf16 %v677, %v676
    %v685 = vpack.c.bf16 %v554, %v553
    %v686 = vpack.c.bf16 %v679, %v678
    %v687 = vpack.c.bf16 %v556, %v555
    %v688 = vpack.c.bf16 %v681, %v680
    %v689 = vpack.c.bf16 %v558, %v557
    %v690 = vpack.c.bf16 %v683, %v682
    %v691 = vpack.c.bf16 %v560, %v559
    %v692 = vld [vmem:[%s3] sm:$0xf]
    %v693 = vld [vmem:[%s3 + $0x4] sm:$0xf]
    %v694 = vld [vmem:[%s3 + $0x8] sm:$0xf]
    %v695 = vld [vmem:[%s3 + $0xc] sm:$0xf]
    %v696 = vld [vmem:[%s3 + $0x10] sm:$0xf]
    %v697 = vld [vmem:[%s3 + $0x14] sm:$0xf]
    %v698 = vld [vmem:[%s3 + $0x18] sm:$0xf]
    %v699 = vld [vmem:[%s3 + $0x1c] sm:$0xf]
    %v700 = vld [vmem:[%s3 + $0x20] sm:$0xf]
    %v701 = vld [vmem:[%s3 + $0x24] sm:$0xf]
    %v702 = vld [vmem:[%s3 + $0x28] sm:$0xf]
    %v703 = vld [vmem:[%s3 + $0x2c] sm:$0xf]
    %v704 = vld [vmem:[%s3 + $0x30] sm:$0xf]
    %v705 = vld [vmem:[%s3 + $0x34] sm:$0xf]
    %v706 = vld [vmem:[%s3 + $0x38] sm:$0xf]
    %v707 = vld [vmem:[%s3 + $0x3c] sm:$0xf]
    %v708 = vld [vmem:[%s3 + $0x40] sm:$0xf]
    %v709 = vld [vmem:[%s3 + $0x44] sm:$0xf]
    %v710 = vld [vmem:[%s3 + $0x48] sm:$0xf]
    %v711 = vld [vmem:[%s3 + $0x4c] sm:$0xf]
    %v712 = vld [vmem:[%s4] sm:$0x1]
    %v714 = vlaneseq
    %v715 = vshrl.u32 %v714, 7
    %v716 = vsub.s32 0, %v715
    %v717 = vrot.slane %v712, %v716
    %v739 = vunpack.c.l.b16 %v692
    %v740 = vunpack.c.l.b16 %v693
    %v741 = vunpack.c.l.b16 %v694
    %v742 = vunpack.c.l.b16 %v695
    %v743 = vunpack.c.l.b16 %v696
    %v744 = vunpack.c.l.b16 %v697
    %v745 = vunpack.c.l.b16 %v698
    %v746 = vunpack.c.l.b16 %v699
    %v747 = vunpack.c.l.b16 %v700
    %v748 = vunpack.c.l.b16 %v701
    %v749 = vunpack.c.l.b16 %v702
    %v750 = vunpack.c.l.b16 %v703
    %v751 = vunpack.c.l.b16 %v704
    %v752 = vunpack.c.l.b16 %v705
    %v753 = vunpack.c.l.b16 %v706
    %v754 = vunpack.c.l.b16 %v707
    %v755 = vunpack.c.l.b16 %v708
    %v756 = vunpack.c.l.b16 %v709
    %v757 = vunpack.c.l.b16 %v710
    %v758 = vunpack.c.l.b16 %v711
    %v759 = vpack.c.b16 %v740, %v739
    %v760 = vpack.c.b16 %v742, %v741
    %v761 = vpack.c.b16 %v744, %v743
    %v762 = vpack.c.b16 %v746, %v745
    %v763 = vpack.c.b16 %v748, %v747
    %v764 = vpack.c.b16 %v750, %v749
    %v765 = vpack.c.b16 %v752, %v751
    %v766 = vpack.c.b16 %v754, %v753
    %v767 = vpack.c.b16 %v756, %v755
    %v768 = vpack.c.b16 %v758, %v757
    %v780 = vsel %vm657, %v685, 0
    %v783 = vsel %vm657, %v687, 0
    %v786 = vsel %vm657, %v689, 0
    %v789 = vsel %vm657, %v691, 0
    %791 = vmatprep.subr.bf16.mxu0 0
    %792 = vmatpush1.bf16.msra.mxu0 %v766
    %793 = vmatprep.subr.bf16.mxu0 0
    %794 = vmatpush1.bf16.msra.mxu0 %v765
    %795 = vmatprep.subr.bf16.mxu0 0
    %796 = vmatpush1.bf16.msra.mxu0 %v764
    %797 = vmatprep.subr.bf16.mxu0 0
    %798 = vmatpush1.bf16.msra.mxu0 %v763
    %799 = vmatprep.subr.bf16.mxu0 0
    %800 = vmatpush1.bf16.msra.mxu0 %v762
    %801 = vmatprep.subr.bf16.mxu0 0
    %802 = vmatpush1.bf16.msra.mxu0 %v761
    %803 = vmatprep.subr.bf16.mxu0 0
    %804 = vmatpush1.bf16.msra.mxu0 %v760
    %805 = vmatprep.subr.bf16.mxu0 0
    %806 = vmatpush1.bf16.msra.mxu0 %v759
    %807 = vmatprep.subr.bf16.mxu0 0
    %808 = vmatpush2.bf16.msra.mxu0 0
    %809 = vmatprep.subr.bf16.mxu0 0
    %810 = vmatpush2.bf16.msra.mxu0 0
    %811 = vmatprep.subr.bf16.mxu0 0
    %812 = vmatpush2.bf16.msra.mxu0 0
    %813 = vmatprep.subr.bf16.mxu0 0
    %814 = vmatpush2.bf16.msra.mxu0 0
    %815 = vmatprep.subr.bf16.mxu0 0
    %816 = vmatpush2.bf16.msra.mxu0 0
    %817 = vmatprep.subr.bf16.mxu0 0
    %818 = vmatpush2.bf16.msra.mxu0 0
    %819 = vmatprep.subr.bf16.mxu0 0
    %820 = vmatpush2.bf16.msra.mxu0 %v768
    %821 = vmatprep.subr.bf16.mxu0 0
    %822 = vmatpush2.bf16.msra.mxu0 %v767
    %823 = vmatprep.mubr.bf16.mxu0 %v780
    %824 = vmatmul.mubr.bf16.gmra.mxu0 %v684
    %v825 = vpop.f32.mrf.mxu0
    %v826 = vadd.f32 %v717, %v825
    %v827 = vpop.f32.mrf.mxu0
    %v828 = vpop.f32.mrf.mxu0
    %v829 = vadd.f32 %v717, %v828
    %v830 = vpop.f32.mrf.mxu0
    %831 = vmatprep.mubr.bf16.mxu0 %v783
    %832 = vmatmul.mubr.bf16.gmra.mxu0 %v686
    %v833 = vpop.f32.mrf.mxu0
    %v834 = vadd.f32 %v717, %v833
    %v835 = vpop.f32.mrf.mxu0
    %v836 = vpop.f32.mrf.mxu0
    %v837 = vadd.f32 %v717, %v836
    %v838 = vpop.f32.mrf.mxu0
    %839 = vmatprep.mubr.bf16.mxu0 %v786
    %840 = vmatmul.mubr.bf16.gmra.mxu0 %v688
    %v841 = vpop.f32.mrf.mxu0
    %v842 = vadd.f32 %v717, %v841
    %v843 = vpop.f32.mrf.mxu0
    %v844 = vpop.f32.mrf.mxu0
    %v845 = vadd.f32 %v717, %v844
    %v846 = vpop.f32.mrf.mxu0
    %847 = vmatprep.mubr.bf16.mxu0 %v789
    %848 = vmatmul.mubr.bf16.gmra.mxu0 %v690
    %v849 = vpop.f32.mrf.mxu0
    %v850 = vadd.f32 %v717, %v849
    %v851 = vpop.f32.mrf.mxu0
    %v852 = vpop.f32.mrf.mxu0
    %v853 = vadd.f32 %v717, %v852
    %v854 = vpop.f32.mrf.mxu0
    %855 = vdwg.mxu0
    %v856 = vmax.f32 %v826, 0.0
    %v857 = vmax.f32 %v829, 0.0
    %v858 = vmax.f32 %v834, 0.0
    %v859 = vmax.f32 %v837, 0.0
    %v860 = vmax.f32 %v842, 0.0
    %v861 = vmax.f32 %v845, 0.0
    %v862 = vmax.f32 %v850, 0.0
    %v863 = vmax.f32 %v853, 0.0
    %v864 = vld [vmem:[%s5] sm:$0x1]
    %v866 = vlaneseq
    %v867 = vshrl.u32 %v866, 7
    %v868 = vsub.s32 0, %v867
    %v869 = vrot.slane %v864, %v868
    %v871 = vmul.f32 %v856, %v869
    %v872 = vmul.f32 %v857, %v869
    %v873 = vmul.f32 %v858, %v869
    %v874 = vmul.f32 %v859, %v869
    %v875 = vmul.f32 %v860, %v869
    %v876 = vmul.f32 %v861, %v869
    %v877 = vmul.f32 %v862, %v869
    %v878 = vmul.f32 %v863, %v869
    %v879 = vld [vmem:[%s6] sm:$0x1]
    %v881 = vlaneseq
    %v882 = vshrl.u32 %v881, 7
    %v883 = vsub.s32 0, %v882
    %v884 = vrot.slane %v879, %v883
    %v886 = vadd.f32 %v871, %v884
    %v887 = vadd.f32 %v872, %v884
    %v888 = vadd.f32 %v873, %v884
    %v889 = vadd.f32 %v874, %v884
    %v890 = vadd.f32 %v875, %v884
    %v891 = vadd.f32 %v876, %v884
    %v892 = vadd.f32 %v877, %v884
    %v893 = vadd.f32 %v878, %v884
    %v894 = vadd.f32 %v42, %v886
    %v895 = vadd.f32 %v43, %v887
    %v896 = vadd.f32 %v44, %v888
    %v897 = vadd.f32 %v45, %v889
    %v898 = vadd.f32 %v46, %v890
    %v899 = vadd.f32 %v47, %v891
    %v900 = vadd.f32 %v48, %v892
    %v901 = vadd.f32 %v49, %v893
    %902 = vst [vmem:[#allocation5] sm:$0xff] %v894
    %903 = vst [vmem:[#allocation5 + $0x8] sm:$0xff] %v895
    %904 = vst [vmem:[#allocation5 + $0x10] sm:$0xff] %v896
    %905 = vst [vmem:[#allocation5 + $0x18] sm:$0xff] %v897
    %906 = vst [vmem:[#allocation5 + $0x20] sm:$0xff] %v898
    %907 = vst [vmem:[#allocation5 + $0x28] sm:$0xff] %v899
    %908 = vst [vmem:[#allocation5 + $0x30] sm:$0xff] %v900
    %909 = vst [vmem:[#allocation5 + $0x38] sm:$0xff] %v901
    // Predicated region
    $region34: #{block_b_forward_nhwc.1} parent=1 // pred_check
      _
    $region35: #{block_b_forward_nhwc.1} parent=1 // pred_check_branch
      %911 = sbr.rel (0) target = $region37
    $region36: #{block_b_forward_nhwc.1} parent=1 // pred_region
      %s913 = ssub.s32 1024, 1024
      %914 = vsyncadd [#allocation4], %s913
      %s915 = sshll.u32 [#allocation5], 4
      %s916 = int_to_ptr.vmem [resolvable:$true] %s915
      %921 = dma.vmem_to_hbm [thread:$0]  %s916, 1024, %s7, [#allocation4], 128, 128, 8
    $region37: #{block_b_forward_nhwc.1} parent=1 // pred_fallthru
      _
    // Predicated region
    $region38: #{block_b_forward_nhwc.1} parent=1 // pred_check
      _
    $region39: #{block_b_forward_nhwc.1} parent=1 // pred_check_branch
      %923 = sbr.rel (0) target = $region41
    $region40: #{block_b_forward_nhwc.1} parent=1 // pred_region
      %924 = dma.done [#allocation4], 1024
    $region41: #{block_b_forward_nhwc.1} parent=1 // pred_fallthru
      _
    %925 = vsyncpa [#allocation3], 1
    %926 = vsyncpa [#allocation4], 1

</llo_original>
